<compile_context>
chip_gen: v5e
topology: v5e:2x2
jax: 0.10.0
libtpu: 0.0.40
codegen_flags: <defaults>
</compile_context>

<pallas_src>
import functools
import numpy as np
import jax
import jax.numpy as jnp
from jax.experimental import pallas as pl
from jax.experimental.pallas import tpu as pltpu


def _round_up(a, m):
    return ((a + m - 1) // m) * m


def _device_vmem_bytes():
    try:
        info = pltpu.get_tpu_info()
        cap = getattr(info, "vmem_capacity_bytes", None)
        if cap:
            return int(cap)
    except Exception:
        pass
    return 64 * 1024 * 1024   # conservative floor (v7x)


# ----------------------------------------------------------------------------
# Crop mask, built exactly like the PyTorch loop (all sizes are static).
# ----------------------------------------------------------------------------
def build_crop_mask(in_h, L, overlap, center_size):
    crop_start = (in_h - in_h // center_size) // 2 - overlap
    start_idx = in_h * crop_start + crop_start
    crop_size = in_h // center_size + overlap * 2
    not_cropped = crop_start * 2

    def seg_len(a, b):  # python-slice length on an axis of size L
        a = max(0, min(a, L))
        b = max(0, min(b, L))
        return max(0, b - a)

    segs = []
    for i in range(crop_size):
        if i == 0:
            segs.append((True, seg_len(0, start_idx)))
        if i == crop_size - 1:
            segs.append((False, seg_len(start_idx, start_idx + crop_size)))
            segs.append((True, seg_len(start_idx + crop_size, in_h ** 2)))
            break
        segs.append((False, seg_len(start_idx, start_idx + crop_size)))
        segs.append((True, seg_len(start_idx + crop_size, start_idx + not_cropped)))
        start_idx += in_h

    mask = np.concatenate([np.full(n, v, dtype=bool) for v, n in segs]) \
        if segs else np.zeros((0,), dtype=bool)
    # torch.where would raise on a shape mismatch; mirror that requirement.
    assert mask.shape[0] == L, f"crop mask length {mask.shape[0]} != L {L}"
    return mask


# ----------------------------------------------------------------------------
# Kernel: one (batch, cin-tile) grid step.  Unfold is fused: the k*k shifted
# views are formed by static-offset loads from the flattened padded image.
# ----------------------------------------------------------------------------
def cropconv_kernel(w_ref, b_ref, x_ref, m_ref, o_ref, acc_ref, *,
                    k, wp, lw_pad):
    # w_ref  : (k*k, Cout_pad, tile_cin) bf16   one (ki,kj) matrix per row
    # b_ref  : (Cout_pad, 1)             f32    bias (zeros if module has none)
    # x_ref  : (1, tile_cin, Sx)         bf16   padded input, spatially flat
    # m_ref  : (1, Lw_pad)               f32    crop mask in the wide layout
    # o_ref  : (1, Cout_pad, Lw_pad)     f32    wide output
    # acc_ref: (Cout_pad, Lw_pad)        f32    accumulator (resident over cin)
    c = pl.program_id(1)

    @pl.when(c == 0)
    def _init():
        acc_ref[...] = jnp.zeros_like(acc_ref)

    acc = acc_ref[...]
    for ki in range(k):
        for kj in range(k):
            d = ki * wp + kj                                  # static offset
            v = x_ref[0, :, pl.ds(d, lw_pad)]                 # shifted view
            acc = acc + jnp.dot(w_ref[ki * k + kj], v,
                                preferred_element_type=jnp.float32)
    acc_ref[...] = acc

    @pl.when(c == pl.num_programs(1) - 1)
    def _finalize():
        o_ref[0] = ((acc_ref[...] + b_ref[...]) * m_ref[...]).astype(o_ref.dtype)


def crop_conv_forward(x, weight, bias=None, *, kernel_size, stride, padding,
                      dilation, overlap, center_size):
    B, Cin, H, W = x.shape
    Cout = weight.shape[0]
    k = kernel_size

    # The module's own forward only line up (crop-mask length / .view) for
    # stride=1, dilation=1; guard instead of silently returning wrong values.
    assert dilation == 1, "CropConv Pallas kernel requires dilation == 1"
    assert stride == 1, "CropConv Pallas kernel requires stride == 1"
    # TODO(synk): stride > 1 would need strided lane gathers (pl.ds stride) —
    # unreachable for this module since the crop mask forces L == H*W.

    out_h = (H - k + 2 * padding) // stride + 1
    out_w = (W - k + 2 * padding) // stride + 1
    L = out_h * out_w
    Hp, Wp = H + 2 * padding, W + 2 * padding
    assert out_w == Wp - (k - 1) and out_h == Hp - (k - 1)

    # --- lane-dense wide layout --------------------------------------------
    Lw = out_h * Wp                              # rows kept at padded width
    Lw_pad = _round_up(Lw, 128)                  # unmasked full-width stores
    # flat spatial extent: largest shifted window is [ (k-1)*(Wp+1), +Lw_pad )
    Sx = _round_up((k - 1) * (Wp + 1) + Lw_pad, 128)
    assert Sx >= Hp * Wp

    # --- channel padding / budget-driven Cin tiling --------------------------
    cout_pad = _round_up(Cout, 16)               # bf16 sublane packing
    vmem_cap = _device_vmem_bytes()
    budget = int(0.6 * vmem_cap)
    fixed_bytes = (3 * cout_pad * Lw_pad * 4         # out block (x2) + acc
                   + 2 * Lw_pad * 4 + 2 * cout_pad * 4)
    assert fixed_bytes < budget, (
        "wide output block does not fit VMEM; "
        "TODO(synk): add output-row tiling with manual halo DMA for huge images")
    avail = budget - fixed_bytes
    per_cin_bytes = 2 * (Sx + k * k * cout_pad) * 2  # x + weight, 2x-buffered bf16
    max_tile_cin = max(8, avail // max(per_cin_bytes, 1))
    cin_pad8 = _round_up(Cin, 8)
    if cin_pad8 <= max_tile_cin:
        cin_pad, tile_cin = cin_pad8, cin_pad8
    else:
        tile_cin = max(128, (max_tile_cin // 128) * 128)
        cin_pad = _round_up(Cin, tile_cin)
    n_cin = cin_pad // tile_cin

    # --- operand packing (bf16, kernel-native layouts) -----------------------
    xp = jnp.pad(x, ((0, 0), (0, cin_pad - Cin),
                     (padding, padding), (padding, padding)))
    x_flat = jnp.pad(xp.reshape(B, cin_pad, Hp * Wp),
                     ((0, 0), (0, 0), (0, Sx - Hp * Wp))).astype(jnp.bfloat16)

    w_r = jnp.transpose(weight, (2, 3, 0, 1)).reshape(k * k, Cout, Cin)
    w_r = jnp.pad(w_r, ((0, 0), (0, cout_pad - Cout),
                        (0, cin_pad - Cin))).astype(jnp.bfloat16)

    if bias is None:
        b_vec = jnp.zeros((cout_pad, 1), jnp.float32)
    else:
        b_vec = jnp.pad(bias.astype(jnp.float32),
                        (0, cout_pad - Cout)).reshape(cout_pad, 1)

    crop_mask = build_crop_mask(H, L, overlap, center_size)          # (L,) bool
    wide = np.zeros((out_h, Wp), np.float32)
    wide[:, :out_w] = crop_mask.reshape(out_h, out_w).astype(np.float32)
    mask_wide_np = np.zeros((1, Lw_pad), np.float32)
    mask_wide_np[0, :Lw] = wide.reshape(-1)
    mask_wide = jnp.asarray(mask_wide_np)

    # --- pallas call ----------------------------------------------------------
    blk_bytes = fixed_bytes + tile_cin * per_cin_bytes
    vmem_limit = int(min(max(2 * blk_bytes, 8 * 1024 * 1024),
                         int(0.75 * vmem_cap)))

    cost = pl.CostEstimate(
        flops=int(2 * B * cout_pad * cin_pad * k * k * Lw),
        transcendentals=0,
        bytes_accessed=int(x_flat.size * 2 + w_r.size * 2 + mask_wide.size * 4
                           + B * cout_pad * Lw_pad * 4),
    )

    kernel = functools.partial(cropconv_kernel, k=k, wp=Wp, lw_pad=Lw_pad)

    out_wide = pl.pallas_call(
        kernel,
        out_shape=jax.ShapeDtypeStruct((B, cout_pad, Lw_pad), jnp.float32),
        grid=(B, n_cin),
        in_specs=[
            pl.BlockSpec((k * k, cout_pad, tile_cin), lambda b, c: (0, 0, c)),
            pl.BlockSpec((cout_pad, 1), lambda b, c: (0, 0)),
            pl.BlockSpec((1, tile_cin, Sx), lambda b, c: (b, c, 0)),
            pl.BlockSpec((1, Lw_pad), lambda b, c: (0, 0)),
        ],
        out_specs=pl.BlockSpec((1, cout_pad, Lw_pad), lambda b, c: (b, 0, 0)),
        scratch_shapes=[pltpu.VMEM((cout_pad, Lw_pad), jnp.float32)],
        compiler_params=pltpu.CompilerParams(
            dimension_semantics=("parallel", "arbitrary"),
            vmem_limit_bytes=vmem_limit),
        cost_estimate=cost,
    )(w_r, b_vec, x_flat, mask_wide)

    # Drop channel / width padding (cheap slices on the small final output).
    out = out_wide[:, :Cout, :Lw].reshape(B, Cout, out_h, Wp)[:, :, :, :out_w]
    return out


# ----------------------------------------------------------------------------
# Test-only reference: explicit unfold + matmul + crop mask (same bf16-cast
# operands as the kernel, f32 accumulation).
# ----------------------------------------------------------------------------
def _unfold_reference(x, k, stride, padding, dilation, out_h, out_w):
    B, C, H, W = x.shape
    xp = jnp.pad(x, ((0, 0), (0, 0), (padding, padding), (padding, padding)))
    cols = []
    for ki in range(k):
        for kj in range(k):
            r0, c0 = ki * dilation, kj * dilation
            cols.append(xp[:, :, r0:r0 + stride * out_h:stride,
                              c0:c0 + stride * out_w:stride])
    return jnp.stack(cols, axis=2).reshape(B, C * k * k, out_h * out_w)


if __name__ == "__main__":
    # Small config consistent with the module (bias=False, dilation=1).
    B, Cin, Cout, H, W = 2, 4, 8, 16, 16
    kernel_size, stride, padding, dilation = 3, 1, 1, 1
    overlap, center_size = 0, 16   # crop_size == 1 -> original module runs

    key = jax.random.PRNGKey(0)
    kx, kw = jax.random.split(key)
    x = jax.random.normal(kx, (B, Cin, H, W), dtype=jnp.float32)

    # Kaiming-normal, mode='fan_out', nonlinearity='relu' (deterministic).
    fan_out = Cout * kernel_size * kernel_size
    std = np.sqrt(2.0 / fan_out)
    weight = jax.random.normal(kw, (Cout, Cin, kernel_size, kernel_size),
                               dtype=jnp.float32) * std

    out = crop_conv_forward(
        x, weight, None, kernel_size=kernel_size, stride=stride,
        padding=padding, dilation=dilation, overlap=overlap,
        center_size=center_size)
    out = jax.block_until_ready(out)

    # Pure-JAX reference on the same bf16-cast operands (f32 accumulation).
    out_h = (H - kernel_size + 2 * padding) // stride + 1
    out_w = (W - kernel_size + 2 * padding) // stride + 1
    L = out_h * out_w
    ref_patches = _unfold_reference(x.astype(jnp.bfloat16), kernel_size, stride,
                                    padding, dilation, out_h, out_w
                                    ).astype(jnp.float32)
    ref_w = weight.reshape(Cout, -1).astype(jnp.bfloat16).astype(jnp.float32)
    ref = jnp.einsum('ok,bkl->bol', ref_w, ref_patches)
    ref_mask = build_crop_mask(H, L, overlap, center_size)
    ref = ref * jnp.asarray(ref_mask, dtype=jnp.float32)[None, None, :]
    ref = ref.reshape(B, Cout, out_h, out_w)

    assert out.shape == (B, Cout, out_h, out_w)
    assert np.allclose(np.asarray(out), np.asarray(ref), atol=1e-4, rtol=1e-4)
    print("KERNEL_OK")
</pallas_src>

<mosaic_0001>
module attributes {stable_mosaic.version = 11 : i64} {
  func.func @cropconv_kernel(%arg0: i32, %arg1: i32, %arg2: memref<9x16x8xbf16, #tpu.memory_space<vmem>>, %arg3: memref<16x1xf32, #tpu.memory_space<vmem>>, %arg4: memref<1x8x512xbf16, #tpu.memory_space<vmem>>, %arg5: memref<1x384xf32, #tpu.memory_space<vmem>>, %arg6: memref<1x16x384xf32, #tpu.memory_space<vmem>>, %arg7: memref<16x384xf32, #tpu.memory_space<vmem>>) attributes {dimension_semantics = [#tpu.dimension_semantics<parallel>, #tpu.dimension_semantics<arbitrary>], iteration_bounds = array<i64: 2, 1>, scalar_prefetch = 0 : i64, scratch_operands = 1 : i64, tpu.core_type = #tpu.core_type<tc>, window_params = [{transform_indices = @transform_0, window_bounds = array<i64: 9, 16, 8>}, {pipeline_mode = #tpu.pipeline_mode<synchronous>, transform_indices = @transform_1, window_bounds = array<i64: 16, 1>}, {transform_indices = @transform_2, window_bounds = array<i64: 1, 8, 512>}, {pipeline_mode = #tpu.pipeline_mode<synchronous>, transform_indices = @transform_3, window_bounds = array<i64: 1, 384>}, {transform_indices = @transform_4, window_bounds = array<i64: 1, 16, 384>}]} {
    %c0_i32 = arith.constant 0 : i32
    %0 = arith.cmpi eq, %arg1, %c0_i32 : i32
    %1 = arith.extui %0 : i1 to i32
    %c0_i32_0 = arith.constant 0 : i32
    %2 = arith.cmpi ne, %1, %c0_i32_0 : i32
    scf.if %2 {
      %cst_54 = arith.constant 0.000000e+00 : f32
      %62 = vector.broadcast %cst_54 : f32 to vector<16x384xf32>
      %c0_55 = arith.constant 0 : index
      %c0_56 = arith.constant 0 : index
      %63 = vector.load %arg7[%c0_55, %c0_56] : memref<16x384xf32, #tpu.memory_space<vmem>>, vector<16x384xf32>
      tpu.vector_store %arg7[%c0_55, %c0_56], %62 {strides = array<i32>} : memref<16x384xf32, #tpu.memory_space<vmem>>, vector<16x384xf32>,
    } else {
    }
    %c0 = arith.constant 0 : index
    %c0_1 = arith.constant 0 : index
    %3 = vector.load %arg7[%c0, %c0_1] : memref<16x384xf32, #tpu.memory_space<vmem>>, vector<16x384xf32>
    %c0_2 = arith.constant 0 : index
    %c0_3 = arith.constant 0 : index
    %c0_4 = arith.constant 0 : index
    %4 = vector.load %arg4[%c0_2, %c0_3, %c0_4] : memref<1x8x512xbf16, #tpu.memory_space<vmem>>, vector<1x8x384xbf16>
    %5 = vector.shape_cast %4 : vector<1x8x384xbf16> to vector<8x384xbf16>
    %c0_5 = arith.constant 0 : index
    %c0_6 = arith.constant 0 : index
    %c0_7 = arith.constant 0 : index
    %6 = vector.load %arg2[%c0_5, %c0_6, %c0_7] : memref<9x16x8xbf16, #tpu.memory_space<vmem>>, vector<1x16x8xbf16>
    %7 = vector.shape_cast %6 : vector<1x16x8xbf16> to vector<16x8xbf16>
    %cst = arith.constant dense<0.000000e+00> : vector<16x384xf32>
    %8 = tpu.matmul %7, %5, %cst {dimension_numbers = #tpu.dot_dimension_numbers<[1], [0], [0], [1], [0, 0, 1, 1], [], []>} : vector<16x8xbf16>, vector<8x384xbf16>, vector<16x384xf32> -> vector<16x384xf32>
    %9 = arith.addf %3, %8 : vector<16x384xf32>
    %c0_8 = arith.constant 0 : index
    %c0_9 = arith.constant 0 : index
    %c1 = arith.constant 1 : index
    %10 = vector.load %arg4[%c0_8, %c0_9, %c1] : memref<1x8x512xbf16, #tpu.memory_space<vmem>>, vector<1x8x384xbf16>
    %11 = vector.shape_cast %10 : vector<1x8x384xbf16> to vector<8x384xbf16>
    %c1_10 = arith.constant 1 : index
    %c0_11 = arith.constant 0 : index
    %c0_12 = arith.constant 0 : index
    %12 = vector.load %arg2[%c1_10, %c0_11, %c0_12] : memref<9x16x8xbf16, #tpu.memory_space<vmem>>, vector<1x16x8xbf16>
    %13 = vector.shape_cast %12 : vector<1x16x8xbf16> to vector<16x8xbf16>
    %cst_13 = arith.constant dense<0.000000e+00> : vector<16x384xf32>
    %14 = tpu.matmul %13, %11, %cst_13 {dimension_numbers = #tpu.dot_dimension_numbers<[1], [0], [0], [1], [0, 0, 1, 1], [], []>} : vector<16x8xbf16>, vector<8x384xbf16>, vector<16x384xf32> -> vector<16x384xf32>
    %15 = arith.addf %9, %14 : vector<16x384xf32>
    %c0_14 = arith.constant 0 : index
    %c0_15 = arith.constant 0 : index
    %c2 = arith.constant 2 : index
    %16 = vector.load %arg4[%c0_14, %c0_15, %c2] : memref<1x8x512xbf16, #tpu.memory_space<vmem>>, vector<1x8x384xbf16>
    %17 = vector.shape_cast %16 : vector<1x8x384xbf16> to vector<8x384xbf16>
    %c2_16 = arith.constant 2 : index
    %c0_17 = arith.constant 0 : index
    %c0_18 = arith.constant 0 : index
    %18 = vector.load %arg2[%c2_16, %c0_17, %c0_18] : memref<9x16x8xbf16, #tpu.memory_space<vmem>>, vector<1x16x8xbf16>
    %19 = vector.shape_cast %18 : vector<1x16x8xbf16> to vector<16x8xbf16>
    %cst_19 = arith.constant dense<0.000000e+00> : vector<16x384xf32>
    %20 = tpu.matmul %19, %17, %cst_19 {dimension_numbers = #tpu.dot_dimension_numbers<[1], [0], [0], [1], [0, 0, 1, 1], [], []>} : vector<16x8xbf16>, vector<8x384xbf16>, vector<16x384xf32> -> vector<16x384xf32>
    %21 = arith.addf %15, %20 : vector<16x384xf32>
    %c0_20 = arith.constant 0 : index
    %c0_21 = arith.constant 0 : index
    %c18 = arith.constant 18 : index
    %22 = vector.load %arg4[%c0_20, %c0_21, %c18] : memref<1x8x512xbf16, #tpu.memory_space<vmem>>, vector<1x8x384xbf16>
    %23 = vector.shape_cast %22 : vector<1x8x384xbf16> to vector<8x384xbf16>
    %c3 = arith.constant 3 : index
    %c0_22 = arith.constant 0 : index
    %c0_23 = arith.constant 0 : index
    %24 = vector.load %arg2[%c3, %c0_22, %c0_23] : memref<9x16x8xbf16, #tpu.memory_space<vmem>>, vector<1x16x8xbf16>
    %25 = vector.shape_cast %24 : vector<1x16x8xbf16> to vector<16x8xbf16>
    %cst_24 = arith.constant dense<0.000000e+00> : vector<16x384xf32>
    %26 = tpu.matmul %25, %23, %cst_24 {dimension_numbers = #tpu.dot_dimension_numbers<[1], [0], [0], [1], [0, 0, 1, 1], [], []>} : vector<16x8xbf16>, vector<8x384xbf16>, vector<16x384xf32> -> vector<16x384xf32>
    %27 = arith.addf %21, %26 : vector<16x384xf32>
    %c0_25 = arith.constant 0 : index
    %c0_26 = arith.constant 0 : index
    %c19 = arith.constant 19 : index
    %28 = vector.load %arg4[%c0_25, %c0_26, %c19] : memref<1x8x512xbf16, #tpu.memory_space<vmem>>, vector<1x8x384xbf16>
    %29 = vector.shape_cast %28 : vector<1x8x384xbf16> to vector<8x384xbf16>
    %c4 = arith.constant 4 : index
    %c0_27 = arith.constant 0 : index
    %c0_28 = arith.constant 0 : index
    %30 = vector.load %arg2[%c4, %c0_27, %c0_28] : memref<9x16x8xbf16, #tpu.memory_space<vmem>>, vector<1x16x8xbf16>
    %31 = vector.shape_cast %30 : vector<1x16x8xbf16> to vector<16x8xbf16>
    %cst_29 = arith.constant dense<0.000000e+00> : vector<16x384xf32>
    %32 = tpu.matmul %31, %29, %cst_29 {dimension_numbers = #tpu.dot_dimension_numbers<[1], [0], [0], [1], [0, 0, 1, 1], [], []>} : vector<16x8xbf16>, vector<8x384xbf16>, vector<16x384xf32> -> vector<16x384xf32>
    %33 = arith.addf %27, %32 : vector<16x384xf32>
    %c0_30 = arith.constant 0 : index
    %c0_31 = arith.constant 0 : index
    %c20 = arith.constant 20 : index
    %34 = vector.load %arg4[%c0_30, %c0_31, %c20] : memref<1x8x512xbf16, #tpu.memory_space<vmem>>, vector<1x8x384xbf16>
    %35 = vector.shape_cast %34 : vector<1x8x384xbf16> to vector<8x384xbf16>
    %c5 = arith.constant 5 : index
    %c0_32 = arith.constant 0 : index
    %c0_33 = arith.constant 0 : index
    %36 = vector.load %arg2[%c5, %c0_32, %c0_33] : memref<9x16x8xbf16, #tpu.memory_space<vmem>>, vector<1x16x8xbf16>
    %37 = vector.shape_cast %36 : vector<1x16x8xbf16> to vector<16x8xbf16>
    %cst_34 = arith.constant dense<0.000000e+00> : vector<16x384xf32>
    %38 = tpu.matmul %37, %35, %cst_34 {dimension_numbers = #tpu.dot_dimension_numbers<[1], [0], [0], [1], [0, 0, 1, 1], [], []>} : vector<16x8xbf16>, vector<8x384xbf16>, vector<16x384xf32> -> vector<16x384xf32>
    %39 = arith.addf %33, %38 : vector<16x384xf32>
    %c0_35 = arith.constant 0 : index
    %c0_36 = arith.constant 0 : index
    %c36 = arith.constant 36 : index
    %40 = vector.load %arg4[%c0_35, %c0_36, %c36] : memref<1x8x512xbf16, #tpu.memory_space<vmem>>, vector<1x8x384xbf16>
    %41 = vector.shape_cast %40 : vector<1x8x384xbf16> to vector<8x384xbf16>
    %c6 = arith.constant 6 : index
    %c0_37 = arith.constant 0 : index
    %c0_38 = arith.constant 0 : index
    %42 = vector.load %arg2[%c6, %c0_37, %c0_38] : memref<9x16x8xbf16, #tpu.memory_space<vmem>>, vector<1x16x8xbf16>
    %43 = vector.shape_cast %42 : vector<1x16x8xbf16> to vector<16x8xbf16>
    %cst_39 = arith.constant dense<0.000000e+00> : vector<16x384xf32>
    %44 = tpu.matmul %43, %41, %cst_39 {dimension_numbers = #tpu.dot_dimension_numbers<[1], [0], [0], [1], [0, 0, 1, 1], [], []>} : vector<16x8xbf16>, vector<8x384xbf16>, vector<16x384xf32> -> vector<16x384xf32>
    %45 = arith.addf %39, %44 : vector<16x384xf32>
    %c0_40 = arith.constant 0 : index
    %c0_41 = arith.constant 0 : index
    %c37 = arith.constant 37 : index
    %46 = vector.load %arg4[%c0_40, %c0_41, %c37] : memref<1x8x512xbf16, #tpu.memory_space<vmem>>, vector<1x8x384xbf16>
    %47 = vector.shape_cast %46 : vector<1x8x384xbf16> to vector<8x384xbf16>
    %c7 = arith.constant 7 : index
    %c0_42 = arith.constant 0 : index
    %c0_43 = arith.constant 0 : index
    %48 = vector.load %arg2[%c7, %c0_42, %c0_43] : memref<9x16x8xbf16, #tpu.memory_space<vmem>>, vector<1x16x8xbf16>
    %49 = vector.shape_cast %48 : vector<1x16x8xbf16> to vector<16x8xbf16>
    %cst_44 = arith.constant dense<0.000000e+00> : vector<16x384xf32>
    %50 = tpu.matmul %49, %47, %cst_44 {dimension_numbers = #tpu.dot_dimension_numbers<[1], [0], [0], [1], [0, 0, 1, 1], [], []>} : vector<16x8xbf16>, vector<8x384xbf16>, vector<16x384xf32> -> vector<16x384xf32>
    %51 = arith.addf %45, %50 : vector<16x384xf32>
    %c0_45 = arith.constant 0 : index
    %c0_46 = arith.constant 0 : index
    %c38 = arith.constant 38 : index
    %52 = vector.load %arg4[%c0_45, %c0_46, %c38] : memref<1x8x512xbf16, #tpu.memory_space<vmem>>, vector<1x8x384xbf16>
    %53 = vector.shape_cast %52 : vector<1x8x384xbf16> to vector<8x384xbf16>
    %c8 = arith.constant 8 : index
    %c0_47 = arith.constant 0 : index
    %c0_48 = arith.constant 0 : index
    %54 = vector.load %arg2[%c8, %c0_47, %c0_48] : memref<9x16x8xbf16, #tpu.memory_space<vmem>>, vector<1x16x8xbf16>
    %55 = vector.shape_cast %54 : vector<1x16x8xbf16> to vector<16x8xbf16>
    %cst_49 = arith.constant dense<0.000000e+00> : vector<16x384xf32>
    %56 = tpu.matmul %55, %53, %cst_49 {dimension_numbers = #tpu.dot_dimension_numbers<[1], [0], [0], [1], [0, 0, 1, 1], [], []>} : vector<16x8xbf16>, vector<8x384xbf16>, vector<16x384xf32> -> vector<16x384xf32>
    %57 = arith.addf %51, %56 : vector<16x384xf32>
    %c0_50 = arith.constant 0 : index
    %c0_51 = arith.constant 0 : index
    %58 = vector.load %arg7[%c0_50, %c0_51] : memref<16x384xf32, #tpu.memory_space<vmem>>, vector<16x384xf32>
    tpu.vector_store %arg7[%c0_50, %c0_51], %57 {strides = array<i32>} : memref<16x384xf32, #tpu.memory_space<vmem>>, vector<16x384xf32>,
    %c0_i32_52 = arith.constant 0 : i32
    %59 = arith.cmpi eq, %arg1, %c0_i32_52 : i32
    %60 = arith.extui %59 : i1 to i32
    %c0_i32_53 = arith.constant 0 : i32
    %61 = arith.cmpi ne, %60, %c0_i32_53 : i32
    scf.if %61 {
      %c0_54 = arith.constant 0 : index
      %c0_55 = arith.constant 0 : index
      %62 = vector.load %arg7[%c0_54, %c0_55] : memref<16x384xf32, #tpu.memory_space<vmem>>, vector<16x384xf32>
      %c0_56 = arith.constant 0 : index
      %c0_57 = arith.constant 0 : index
      %63 = vector.load %arg3[%c0_56, %c0_57] : memref<16x1xf32, #tpu.memory_space<vmem>>, vector<16x1xf32>
      %64 = vector.broadcast %63 : vector<16x1xf32> to vector<16x384xf32>
      %65 = arith.addf %62, %64 : vector<16x384xf32>
      %c0_58 = arith.constant 0 : index
      %c0_59 = arith.constant 0 : index
      %66 = vector.load %arg5[%c0_58, %c0_59] : memref<1x384xf32, #tpu.memory_space<vmem>>, vector<1x384xf32>
      %67 = vector.broadcast %66 : vector<1x384xf32> to vector<16x384xf32>
      %68 = arith.mulf %65, %67 : vector<16x384xf32>
      %c0_60 = arith.constant 0 : index
      %c0_61 = arith.constant 0 : index
      %c0_62 = arith.constant 0 : index
      %69 = vector.load %arg6[%c0_60, %c0_61, %c0_62] : memref<1x16x384xf32, #tpu.memory_space<vmem>>, vector<1x16x384xf32>
      %70 = vector.shape_cast %69 : vector<1x16x384xf32> to vector<16x384xf32>
      %71 = vector.shape_cast %68 : vector<16x384xf32> to vector<1x16x384xf32>
      tpu.vector_store %arg6[%c0_60, %c0_61, %c0_62], %71 {strides = array<i32>} : memref<1x16x384xf32, #tpu.memory_space<vmem>>, vector<1x16x384xf32>,
    } else {
    }
    return
  }
  func.func @transform_0(%arg0: i32, %arg1: i32) -> (i32, i32, i32) {
    %c0_i32 = arith.constant 0 : i32
    %c0_i32_0 = arith.constant 0 : i32
    %c0_i32_1 = arith.constant 0 : i32
    return %c0_i32, %c0_i32_0, %arg1 : i32, i32, i32
  }
  func.func @transform_1(%arg0: i32, %arg1: i32) -> (i32, i32) {
    %c0_i32 = arith.constant 0 : i32
    %c0_i32_0 = arith.constant 0 : i32
    %c0_i32_1 = arith.constant 0 : i32
    return %c0_i32, %c0_i32_0 : i32, i32
  }
  func.func @transform_2(%arg0: i32, %arg1: i32) -> (i32, i32, i32) {
    %c0_i32 = arith.constant 0 : i32
    %c0_i32_0 = arith.constant 0 : i32
    return %arg0, %arg1, %c0_i32 : i32, i32, i32
  }
  func.func @transform_3(%arg0: i32, %arg1: i32) -> (i32, i32) {
    %c0_i32 = arith.constant 0 : i32
    %c0_i32_0 = arith.constant 0 : i32
    %c0_i32_1 = arith.constant 0 : i32
    return %c0_i32, %c0_i32_0 : i32, i32
  }
  func.func @transform_4(%arg0: i32, %arg1: i32) -> (i32, i32, i32) {
    %c0_i32 = arith.constant 0 : i32
    %c0_i32_0 = arith.constant 0 : i32
    %c0_i32_1 = arith.constant 0 : i32
    return %arg0, %c0_i32, %c0_i32_0 : i32, i32, i32
  }
}

</mosaic_0001>

<llo_original>
// kernel: tpu_custom_call.1
$region0: #{tpu_custom_call.1}
  #allocation0 [shape = 'u32[]', space=smem, size = 0x4, offset = 0x4, fixed_abs, tag = 'smem constant byte address 0x4 - core index']
  #allocation1 [shape = 'u32[72,128]{1,0:T(1,128)}', space=vmem, size = 0x9000, scoped, tag = 'internal scratch']
  #allocation2 [shape = 'f32[16,384]{1,0:T(8,128)}', space=vmem, size = 0x6000, scoped, tag = 'scratch operand']
  %s0 = inlined_call_operand.vmem [shape: bf16[9,16,8], index: 0, kind: input, shape index: {}]
  %s1 = inlined_call_operand.vmem [shape: f32[16,1], index: 1, kind: input, shape index: {}]
  %s2 = inlined_call_operand.vmem [shape: bf16[2,8,512], index: 2, kind: input, shape index: {}]
  %s3 = inlined_call_operand.vmem [shape: f32[1,384], index: 3, kind: input, shape index: {}]
  %s4 = inlined_call_operand.hbm [shape: f32[2,16,384], index: 4, kind: output, shape index: {}]
  %s5 = sld [smem:[#allocation0]]
  $region57: #{tpu_custom_call.1} parent=0
    _
  %s7 = ssub.s32 1, %s5
  %s8 = scalar_select 0, %s7, %s5
  $region1: #{tpu_custom_call.1} parent=0
    #allocation3 [shape = 'u8[49152]{0}', space=vmem, size = 0xc000, scoped, tag = 'output window, operand 0']
    #allocation4 [shape = 's32[2]{0}', space=sflag, size = 0x8, scoped, tag = 'scoped memory for tpu_custom_call.1']
    %9 = vsyncpa [#allocation4], 0
    %s10 = scalar_lea.sflag [#allocation4], 1
    %11 = vsyncpa %s10, 0
    loop: start=0, step=1, limit=4
    $region2: #{tpu_custom_call.1} parent=1 // loop_pre_header
      _
    $region3: #{tpu_custom_call.1} parent=1 // loop_header
      %s13 = sphi 0, %s17
      %p14 = scmp.ge.s32.totalorder %s13, 4
      %s20 = sphi 0, %s32
      %s21 = sphi 0, %s28
      %s22 = sphi 0, %s20
      %s23 = sphi 0, %s21
      %s24 = sphi 0, %s22
      %s25 = sphi 0, %s23
      %s35 = sphi 0, %s37
      %s38 = sphi 0, %s35
      %s39 = sphi 0, %s38
      %s55 = sphi 0, %s39
      %s59 = sphi 0, %s59
      %s61 = sphi 0, %s59
      %s62 = sphi 0, %s61
      %s76 = sphi 0, %s62
      %s84 = sphi 0, %s86
      %s87 = sphi 0, %s84
      %s88 = sphi 0, %s87
      %s104 = sphi 0, %s88
      %s108 = sphi 0, %s108
      %s110 = sphi 0, %s108
      %s111 = sphi 0, %s110
      %s125 = sphi 0, %s111
      %s131 = sphi 0, %s133
      %s134 = sphi 0, %s131
      %s135 = sphi 0, %s134
      %s151 = sphi 0, %s135
    $region4: #{tpu_custom_call.1} parent=1 // loop_header_branch
      %16 = sbr.rel (%p14) target = $region8
    $region5: #{tpu_custom_call.1} parent=1 // loop_body
      %s18 = ssub.s32 %s13, 1
      %s19 = ssub.s32 %s13, 2
      %s26 = sadd.s32 1, %s21
      %p27 = scmp.ge.s32.totalorder %s26, 1
      %s28 = scalar_select %p27, 0, %s26
      %s29 = sadd.s32 1, %s20
      %s30 = scalar_select %p27, %s29, %s20
      %p31 = scmp.ge.s32.totalorder %s30, 2
      %s32 = scalar_select %p31, 0, %s30
      %s33 = ssub.s32 %s21, %s28
      %p34 = scmp.eq.s32.totalorder %s33, 0
      %s36 = sadd.s32 %s35, 1
      %s37 = scalar_select %p34, %s35, %s36
      %p40 = pneg %p34
      %p41 = scmp.eq.s32.totalorder %s13, 1
      %p42 = por %p40, %p41
      %p43 = scmp.ne.s32.totalorder %s35, %s38
      %p44 = scmp.eq.s32.totalorder %s13, 0
      %p45 = por %p43, %p44
      %p46 = scmp.ne.s32.totalorder %s35, %s38
      %p47 = scmp.eq.s32.totalorder %s18, 1
      %p48 = por %p46, %p47
      %p49 = scmp.ne.s32.totalorder %s38, %s39
      %p50 = scmp.eq.s32.totalorder %s18, 0
      %p51 = por %p49, %p50
      %p52 = scmp.ne.s32.totalorder %s38, %s39
      %p53 = scmp.eq.s32.totalorder %s19, 1
      %p54 = por %p52, %p53
      %p56 = scmp.ne.s32.totalorder %s39, %s55
      %p57 = scmp.eq.s32.totalorder %s19, 0
      %p58 = por %p56, %p57
      %s60 = sadd.s32 %s59, 1
      %p63 = scmp.eq.s32.totalorder %s13, 1
      %p64 = scmp.ne.s32.totalorder %s59, %s61
      %p65 = scmp.eq.s32.totalorder %s13, 0
      %p66 = por %p64, %p65
      %p67 = scmp.ne.s32.totalorder %s59, %s61
      %p68 = scmp.eq.s32.totalorder %s18, 1
      %p69 = por %p67, %p68
      %p70 = scmp.ne.s32.totalorder %s61, %s62
      %p71 = scmp.eq.s32.totalorder %s18, 0
      %p72 = por %p70, %p71
      %p73 = scmp.ne.s32.totalorder %s61, %s62
      %p74 = scmp.eq.s32.totalorder %s19, 1
      %p75 = por %p73, %p74
      %p77 = scmp.ne.s32.totalorder %s62, %s76
      %p78 = scmp.eq.s32.totalorder %s19, 0
      %p79 = por %p77, %p78
      %s80 = ssub.s32 %s20, %s32
      %s81 = ssub.s32 %s21, %s28
      %s82 = sor.u32 %s80, %s81
      %p83 = scmp.eq.s32.totalorder %s82, 0
      %s85 = sadd.s32 %s84, 1
      %s86 = scalar_select %p83, %s84, %s85
      %p89 = pneg %p83
      %p90 = scmp.eq.s32.totalorder %s13, 1
      %p91 = por %p89, %p90
      %p92 = scmp.ne.s32.totalorder %s84, %s87
      %p93 = scmp.eq.s32.totalorder %s13, 0
      %p94 = por %p92, %p93
      %p95 = scmp.ne.s32.totalorder %s84, %s87
      %p96 = scmp.eq.s32.totalorder %s18, 1
      %p97 = por %p95, %p96
      %p98 = scmp.ne.s32.totalorder %s87, %s88
      %p99 = scmp.eq.s32.totalorder %s18, 0
      %p100 = por %p98, %p99
      %p101 = scmp.ne.s32.totalorder %s87, %s88
      %p102 = scmp.eq.s32.totalorder %s19, 1
      %p103 = por %p101, %p102
      %p105 = scmp.ne.s32.totalorder %s88, %s104
      %p106 = scmp.eq.s32.totalorder %s19, 0
      %p107 = por %p105, %p106
      %s109 = sadd.s32 %s108, 1
      %p112 = scmp.eq.s32.totalorder %s13, 1
      %p113 = scmp.ne.s32.totalorder %s108, %s110
      %p114 = scmp.eq.s32.totalorder %s13, 0
      %p115 = por %p113, %p114
      %p116 = scmp.ne.s32.totalorder %s108, %s110
      %p117 = scmp.eq.s32.totalorder %s18, 1
      %p118 = por %p116, %p117
      %p119 = scmp.ne.s32.totalorder %s110, %s111
      %p120 = scmp.eq.s32.totalorder %s18, 0
      %p121 = por %p119, %p120
      %p122 = scmp.ne.s32.totalorder %s110, %s111
      %p123 = scmp.eq.s32.totalorder %s19, 1
      %p124 = por %p122, %p123
      %p126 = scmp.ne.s32.totalorder %s111, %s125
      %p127 = scmp.eq.s32.totalorder %s19, 0
      %p128 = por %p126, %p127
      %s129 = ssub.s32 %s20, %s32
      %p130 = scmp.eq.s32.totalorder %s129, 0
      %s132 = sadd.s32 %s131, 1
      %s133 = scalar_select %p130, %s131, %s132
      %p136 = pneg %p130
      %p137 = scmp.eq.s32.totalorder %s13, 1
      %p138 = por %p136, %p137
      %p139 = scmp.ne.s32.totalorder %s131, %s134
      %p140 = scmp.eq.s32.totalorder %s13, 0
      %p141 = por %p139, %p140
      %p142 = scmp.ne.s32.totalorder %s131, %s134
      %p143 = scmp.eq.s32.totalorder %s18, 1
      %p144 = por %p142, %p143
      %p145 = scmp.ne.s32.totalorder %s134, %s135
      %p146 = scmp.eq.s32.totalorder %s18, 0
      %p147 = por %p145, %p146
      %p148 = scmp.ne.s32.totalorder %s134, %s135
      %p149 = scmp.eq.s32.totalorder %s19, 1
      %p150 = por %p148, %p149
      %p152 = scmp.ne.s32.totalorder %s135, %s151
      %p153 = scmp.eq.s32.totalorder %s19, 0
      %p154 = por %p152, %p153
      %p155 = scmp.le.s32.totalorder 1, %s13
      %p156 = scmp.lt.s32.totalorder %s13, 3
      %p157 = pnand %p155, %p156
      %p158 = pneg %p157
      // Predicated region
      $region9: #{tpu_custom_call.1} parent=5 // pred_check
        _
      $region10: #{tpu_custom_call.1} parent=5 // pred_check_branch
        %160 = sbr.rel (%p157) target = $region12
      $region11: #{tpu_custom_call.1} parent=5 // pred_region
        %s161 = ssub.s32 %s13, 1
        // Predicated region
        $region13: #{tpu_custom_call.1} parent=11 // pred_check
          %p162 = pneg %p51
        $region14: #{tpu_custom_call.1} parent=11 // pred_check_branch
          %164 = sbr.rel (%p162) target = $region16
        $region15: #{tpu_custom_call.1} parent=11 // pred_region
          %p165 = scmp.lt.s32.totalorder %s23, 0
          %s166 = scalar_select %p165, %s23, 0
          %s167 = smul.addr %s166, 4
          %s168 = scalar_lea.vmem %s0, %s167
        $region16: #{tpu_custom_call.1} parent=11 // pred_fallthru
          _
        // Predicated region
        $region17: #{tpu_custom_call.1} parent=11 // pred_check
          %p169 = pneg %p72
        $region18: #{tpu_custom_call.1} parent=11 // pred_check_branch
          %171 = sbr.rel (%p169) target = $region20
        $region19: #{tpu_custom_call.1} parent=11 // pred_region
          _
        $region20: #{tpu_custom_call.1} parent=11 // pred_fallthru
          _
        // Predicated region
        $region21: #{tpu_custom_call.1} parent=11 // pred_check
          %p172 = pneg %p121
        $region22: #{tpu_custom_call.1} parent=11 // pred_check_branch
          %174 = sbr.rel (%p172) target = $region24
        $region23: #{tpu_custom_call.1} parent=11 // pred_region
          _
        $region24: #{tpu_custom_call.1} parent=11 // pred_fallthru
          _
      $region12: #{tpu_custom_call.1} parent=5 // pred_fallthru
        _
      %p175 = scmp.lt.s32.totalorder %s13, 2
      // Predicated region
      $region25: #{tpu_custom_call.1} parent=5 // pred_check
        %p176 = pneg %p175
      $region26: #{tpu_custom_call.1} parent=5 // pred_check_branch
        %178 = sbr.rel (%p176) target = $region28
      $region27: #{tpu_custom_call.1} parent=5 // pred_region
        // Predicated region
        $region29: #{tpu_custom_call.1} parent=27 // pred_check
          %p179 = pneg %p94
        $region30: #{tpu_custom_call.1} parent=27 // pred_check_branch
          %181 = sbr.rel (%p179) target = $region32
        $region31: #{tpu_custom_call.1} parent=27 // pred_region
          %p182 = scmp.lt.s32.totalorder %s20, 1
          %s183 = scalar_select %p182, %s20, 1
          %p184 = scmp.lt.s32.totalorder %s21, 0
          %s185 = scalar_select %p184, %s21, 0
          %s186 = smul.addr %s185, 4
          %s187 = smul.addr %s183, 4
          %s188 = sadd.s32 %s186, %s187
          %s189 = smul.addr %s188, 4
          %s190 = scalar_lea.vmem %s2, %s189
        $region32: #{tpu_custom_call.1} parent=27 // pred_fallthru
          _
      $region28: #{tpu_custom_call.1} parent=5 // pred_fallthru
        _
      %p191 = scmp.le.s32.totalorder 1, %s13
      %p192 = scmp.lt.s32.totalorder %s13, 3
      %p193 = pnand %p191, %p192
      %p194 = pneg %p193
      // Predicated region
      $region33: #{tpu_custom_call.1} parent=5 // pred_check
        _
      $region34: #{tpu_custom_call.1} parent=5 // pred_check_branch
        %196 = sbr.rel (%p193) target = $region36
      $region35: #{tpu_custom_call.1} parent=5 // pred_region
        %s197 = ssub.s32 %s13, 1
        %p198 = scmp.lt.s32.totalorder %s23, 0
        %s199 = scalar_select %p198, %s23, 0
        %s200 = smul.addr %s199, 4
        %s201 = scalar_lea.vmem %s0, %s200
        %p202 = pneg %p51
        %p203 = pneg %p48
        %p204 = pneg %p72
        %p205 = pneg %p69
        %p206 = scmp.lt.s32.totalorder %s22, 1
        %s207 = scalar_select %p206, %s22, 1
        %p208 = scmp.lt.s32.totalorder %s23, 0
        %s209 = scalar_select %p208, %s23, 0
        %s210 = smul.addr %s209, 4
        %s211 = smul.addr %s207, 4
        %s212 = sadd.s32 %s210, %s211
        %s213 = smul.addr %s212, 4
        %s214 = scalar_lea.vmem %s2, %s213
        %p215 = pneg %p100
        %p216 = pneg %p97
        %p217 = pneg %p121
        %p218 = pneg %p118
        %p219 = pneg %p147
        %p220 = pneg %p144
        %s221 = sand.u32 %s134, 1
        %s222 = scalar_lea.sflag [#allocation4], %s221
        %s223 = sand.u32 %s134, 1
        %s224 = smul.addr %s223, 48
        %s225 = scalar_lea.vmem [#allocation3], %s224
        %p226 = scmp.lt.s32.totalorder %s23, 0
        %s227 = scalar_select %p226, %s23, 0
        %s228 = smul.addr %s227, 4
        %s229 = scalar_lea.vmem %s0, %s228
        %p230 = scmp.lt.s32.totalorder %s22, 1
        %s231 = scalar_select %p230, %s22, 1
        %p232 = scmp.lt.s32.totalorder %s23, 0
        %s233 = scalar_select %p232, %s23, 0
        %s234 = smul.addr %s233, 4
        %s235 = smul.addr %s231, 4
        %s236 = sadd.s32 %s234, %s235
        %s237 = smul.addr %s236, 4
        %s238 = scalar_lea.vmem %s2, %s237
        %p240 = scmp.eq.s32.totalorder %s23, 0
        // Predicated region
        $region37: #{tpu_custom_call.1} parent=35 // pred_check
          %p241 = pneg %p240
        $region38: #{tpu_custom_call.1} parent=35 // pred_check_branch
          %243 = sbr.rel (%p241) target = $region40
        $region39: #{tpu_custom_call.1} parent=35 // pred_region
          %244 = vst [vmem:[#allocation2] sm:$0xff] 0.0
          %245 = vst [vmem:[#allocation2 + $0x8] sm:$0xff] 0.0
          %246 = vst [vmem:[#allocation2 + $0x10] sm:$0xff] 0.0
          %247 = vst [vmem:[#allocation2 + $0x18] sm:$0xff] 0.0
          %248 = vst [vmem:[#allocation2 + $0x20] sm:$0xff] 0.0
          %249 = vst [vmem:[#allocation2 + $0x28] sm:$0xff] 0.0
        $region40: #{tpu_custom_call.1} parent=35 // pred_fallthru
          _
        %v250 = vld [vmem:[#allocation2] sm:$0xff]
        %v251 = vld [vmem:[#allocation2 + $0x8] sm:$0xff]
        %v252 = vld [vmem:[#allocation2 + $0x10] sm:$0xff]
        %v253 = vld [vmem:[#allocation2 + $0x18] sm:$0xff]
        %v254 = vld [vmem:[#allocation2 + $0x20] sm:$0xff]
        %v255 = vld [vmem:[#allocation2 + $0x28] sm:$0xff]
        %v256 = vld [vmem:[%s238] sm:$0xff]
        %v257 = vld [vmem:[%s238 + $0x8] sm:$0xf]
        %v258 = vld [vmem:[%s229] sm:$0xf]
        %v259 = vld [vmem:[%s229 + $0x4] sm:$0xf]
        %v262 = vunpack.c.l.b16 %v258
        %v263 = vunpack.c.l.b16 %v259
        %v264 = vpack.c.b16 %v263, %v262
        %v267 = vunpack.c.l.b16 %v256
        %v268 = vunpack.c.h.b16 %v256
        %v269 = vunpack.c.l.b16 %v257
        %v270 = vpack.c.b16 %v267, %v267
        %v271 = vpack.c.b16 %v268, %v268
        %v272 = vpack.c.b16 %v269, %v269
        %vm273 = vcmask 64512
        %v275 = vsel %vm273, %v264, 0
        %vm277 = vcmask 1043456
        %v279 = vsel %vm277, %v270, 0
        %v282 = vsel %vm277, %v271, 0
        %v285 = vsel %vm277, %v272, 0
        %287 = vmatpush.bf16.msra.mxu0 0
        %288 = vmatpush.bf16.msra.mxu0 0
        %289 = vmatpush.bf16.msra.mxu0 0
        %290 = vmatpush.bf16.msra.mxu0 0
        %291 = vmatpush.bf16.msra.mxu0 0
        %292 = vmatpush.bf16.msra.mxu0 0
        %293 = vmatpush.bf16.msra.mxu0 0
        %294 = vmatpush.bf16.msra.mxu0 %v279
        %295 = vmatmul.bf16.gmra.mxu0 %v275
        %v296 = vpop.f32.mrf.mxu0
        %v297 = vadd.f32 0.0, %v296
        %v298 = vpop.f32.mrf.mxu0
        %v299 = vadd.f32 0.0, %v298
        %300 = vdwg.mxu0
        %301 = vmatpush.bf16.msra.mxu0 0
        %302 = vmatpush.bf16.msra.mxu0 0
        %303 = vmatpush.bf16.msra.mxu0 0
        %304 = vmatpush.bf16.msra.mxu0 0
        %305 = vmatpush.bf16.msra.mxu0 0
        %306 = vmatpush.bf16.msra.mxu0 0
        %307 = vmatpush.bf16.msra.mxu0 0
        %308 = vmatpush.bf16.msra.mxu0 %v282
        %309 = vmatmul.bf16.gmra.mxu0 %v275
        %v310 = vpop.f32.mrf.mxu0
        %v311 = vadd.f32 0.0, %v310
        %v312 = vpop.f32.mrf.mxu0
        %v313 = vadd.f32 0.0, %v312
        %314 = vdwg.mxu0
        %315 = vmatpush.bf16.msra.mxu0 0
        %316 = vmatpush.bf16.msra.mxu0 0
        %317 = vmatpush.bf16.msra.mxu0 0
        %318 = vmatpush.bf16.msra.mxu0 0
        %319 = vmatpush.bf16.msra.mxu0 0
        %320 = vmatpush.bf16.msra.mxu0 0
        %321 = vmatpush.bf16.msra.mxu0 0
        %322 = vmatpush.bf16.msra.mxu0 %v285
        %323 = vmatmul.bf16.gmra.mxu0 %v275
        %v324 = vpop.f32.mrf.mxu0
        %v325 = vadd.f32 0.0, %v324
        %v326 = vpop.f32.mrf.mxu0
        %v327 = vadd.f32 0.0, %v326
        %328 = vdwg.mxu0
        %v329 = vadd.f32 %v250, %v297
        %v330 = vadd.f32 %v251, %v311
        %v331 = vadd.f32 %v252, %v325
        %v332 = vadd.f32 %v253, %v299
        %v333 = vadd.f32 %v254, %v313
        %v334 = vadd.f32 %v255, %v327
        %v335 = vld [vmem:[%s238] sm:$0xff]
        %v336 = vld [vmem:[%s238 + $0x8] sm:$0xff]
        %s337 = scalar_lea.vmem %s229, 8
        %v338 = vld [vmem:[%s337] sm:$0xf]
        %v339 = vld [vmem:[%s337 + $0x4] sm:$0xf]
        %v342 = vunpack.c.l.b16 %v338
        %v343 = vunpack.c.l.b16 %v339
        %v344 = vpack.c.b16 %v343, %v342
        %v347 = vunpack.c.l.b16 %v335
        %v348 = vunpack.c.h.b16 %v335
        %v349 = vunpack.c.l.b16 %v336
        %v350 = vunpack.c.h.b16 %v336
        %v351 = vpack.c.b16 %v347, %v347
        %v352 = vpack.c.b16 %v348, %v348
        %v353 = vpack.c.b16 %v349, %v349
        %v354 = vpack.c.b16 %v350, %v350
        %355 = vrot.lane.b32.xlu0 %v351, 127
        %v356 = vpop.permute.xlu0 %355
        %357 = vrot.lane.b32.xlu0 %v352, 127
        %v358 = vpop.permute.xlu0 %357
        %359 = vrot.lane.b32.xlu0 %v353, 127
        %v360 = vpop.permute.xlu0 %359
        %361 = vrot.lane.b32.xlu0 %v354, 127
        %v362 = vpop.permute.xlu0 %361
        %vm363 = vcmask 1039360
        %v364 = vsel %vm363, %v356, %v358
        %v365 = vsel %vm363, %v358, %v360
        %v366 = vsel %vm363, %v360, %v362
        %v368 = vsel %vm273, %v344, 0
        %v371 = vsel %vm277, %v364, 0
        %v374 = vsel %vm277, %v365, 0
        %v377 = vsel %vm277, %v366, 0
        %379 = vmatpush.bf16.msra.mxu0 0
        %380 = vmatpush.bf16.msra.mxu0 0
        %381 = vmatpush.bf16.msra.mxu0 0
        %382 = vmatpush.bf16.msra.mxu0 0
        %383 = vmatpush.bf16.msra.mxu0 0
        %384 = vmatpush.bf16.msra.mxu0 0
        %385 = vmatpush.bf16.msra.mxu0 0
        %386 = vmatpush.bf16.msra.mxu0 %v371
        %387 = vmatmul.bf16.gmra.mxu0 %v368
        %v388 = vpop.f32.mrf.mxu0
        %v389 = vadd.f32 0.0, %v388
        %v390 = vpop.f32.mrf.mxu0
        %v391 = vadd.f32 0.0, %v390
        %392 = vdwg.mxu0
        %393 = vmatpush.bf16.msra.mxu0 0
        %394 = vmatpush.bf16.msra.mxu0 0
        %395 = vmatpush.bf16.msra.mxu0 0
        %396 = vmatpush.bf16.msra.mxu0 0
        %397 = vmatpush.bf16.msra.mxu0 0
        %398 = vmatpush.bf16.msra.mxu0 0
        %399 = vmatpush.bf16.msra.mxu0 0
        %400 = vmatpush.bf16.msra.mxu0 %v374
        %401 = vmatmul.bf16.gmra.mxu0 %v368
        %v402 = vpop.f32.mrf.mxu0
        %v403 = vadd.f32 0.0, %v402
        %v404 = vpop.f32.mrf.mxu0
        %v405 = vadd.f32 0.0, %v404
        %406 = vdwg.mxu0
        %407 = vmatpush.bf16.msra.mxu0 0
        %408 = vmatpush.bf16.msra.mxu0 0
        %409 = vmatpush.bf16.msra.mxu0 0
        %410 = vmatpush.bf16.msra.mxu0 0
        %411 = vmatpush.bf16.msra.mxu0 0
        %412 = vmatpush.bf16.msra.mxu0 0
        %413 = vmatpush.bf16.msra.mxu0 0
        %414 = vmatpush.bf16.msra.mxu0 %v377
        %415 = vmatmul.bf16.gmra.mxu0 %v368
        %v416 = vpop.f32.mrf.mxu0
        %v417 = vadd.f32 0.0, %v416
        %v418 = vpop.f32.mrf.mxu0
        %v419 = vadd.f32 0.0, %v418
        %420 = vdwg.mxu0
        %v421 = vadd.f32 %v329, %v389
        %v422 = vadd.f32 %v330, %v403
        %v423 = vadd.f32 %v331, %v417
        %v424 = vadd.f32 %v332, %v391
        %v425 = vadd.f32 %v333, %v405
        %v426 = vadd.f32 %v334, %v419
        %s427 = scalar_lea.vmem %s229, 16
        %v428 = vld [vmem:[%s427] sm:$0xf]
        %v429 = vld [vmem:[%s427 + $0x4] sm:$0xf]
        %v432 = vunpack.c.l.b16 %v428
        %v433 = vunpack.c.l.b16 %v429
        %v434 = vpack.c.b16 %v433, %v432
        %435 = vrot.lane.b32.xlu0 %v351, 126
        %v436 = vpop.permute.xlu0 %435
        %437 = vrot.lane.b32.xlu0 %v352, 126
        %v438 = vpop.permute.xlu0 %437
        %439 = vrot.lane.b32.xlu0 %v353, 126
        %v440 = vpop.permute.xlu0 %439
        %441 = vrot.lane.b32.xlu0 %v354, 126
        %v442 = vpop.permute.xlu0 %441
        %vm443 = vcmask 1031168
        %v444 = vsel %vm443, %v436, %v438
        %v445 = vsel %vm443, %v438, %v440
        %v446 = vsel %vm443, %v440, %v442
        %v448 = vsel %vm273, %v434, 0
        %v451 = vsel %vm277, %v444, 0
        %v454 = vsel %vm277, %v445, 0
        %v457 = vsel %vm277, %v446, 0
        %459 = vmatpush.bf16.msra.mxu0 0
        %460 = vmatpush.bf16.msra.mxu0 0
        %461 = vmatpush.bf16.msra.mxu0 0
        %462 = vmatpush.bf16.msra.mxu0 0
        %463 = vmatpush.bf16.msra.mxu0 0
        %464 = vmatpush.bf16.msra.mxu0 0
        %465 = vmatpush.bf16.msra.mxu0 0
        %466 = vmatpush.bf16.msra.mxu0 %v451
        %467 = vmatmul.bf16.gmra.mxu0 %v448
        %v468 = vpop.f32.mrf.mxu0
        %v469 = vadd.f32 0.0, %v468
        %v470 = vpop.f32.mrf.mxu0
        %v471 = vadd.f32 0.0, %v470
        %472 = vdwg.mxu0
        %473 = vmatpush.bf16.msra.mxu0 0
        %474 = vmatpush.bf16.msra.mxu0 0
        %475 = vmatpush.bf16.msra.mxu0 0
        %476 = vmatpush.bf16.msra.mxu0 0
        %477 = vmatpush.bf16.msra.mxu0 0
        %478 = vmatpush.bf16.msra.mxu0 0
        %479 = vmatpush.bf16.msra.mxu0 0
        %480 = vmatpush.bf16.msra.mxu0 %v454
        %481 = vmatmul.bf16.gmra.mxu0 %v448
        %v482 = vpop.f32.mrf.mxu0
        %v483 = vadd.f32 0.0, %v482
        %v484 = vpop.f32.mrf.mxu0
        %v485 = vadd.f32 0.0, %v484
        %486 = vdwg.mxu0
        %487 = vmatpush.bf16.msra.mxu0 0
        %488 = vmatpush.bf16.msra.mxu0 0
        %489 = vmatpush.bf16.msra.mxu0 0
        %490 = vmatpush.bf16.msra.mxu0 0
        %491 = vmatpush.bf16.msra.mxu0 0
        %492 = vmatpush.bf16.msra.mxu0 0
        %493 = vmatpush.bf16.msra.mxu0 0
        %494 = vmatpush.bf16.msra.mxu0 %v457
        %495 = vmatmul.bf16.gmra.mxu0 %v448
        %v496 = vpop.f32.mrf.mxu0
        %v497 = vadd.f32 0.0, %v496
        %v498 = vpop.f32.mrf.mxu0
        %v499 = vadd.f32 0.0, %v498
        %500 = vdwg.mxu0
        %v501 = vadd.f32 %v421, %v469
        %v502 = vadd.f32 %v422, %v483
        %v503 = vadd.f32 %v423, %v497
        %v504 = vadd.f32 %v424, %v471
        %v505 = vadd.f32 %v425, %v485
        %v506 = vadd.f32 %v426, %v499
        %s507 = scalar_lea.vmem %s229, 24
        %v508 = vld [vmem:[%s507] sm:$0xf]
        %v509 = vld [vmem:[%s507 + $0x4] sm:$0xf]
        %v512 = vunpack.c.l.b16 %v508
        %v513 = vunpack.c.l.b16 %v509
        %v514 = vpack.c.b16 %v513, %v512
        %515 = vrot.lane.b32.xlu0 %v351, 110
        %v516 = vpop.permute.xlu0 %515
        %517 = vrot.lane.b32.xlu0 %v352, 110
        %v518 = vpop.permute.xlu0 %517
        %519 = vrot.lane.b32.xlu0 %v353, 110
        %v520 = vpop.permute.xlu0 %519
        %521 = vrot.lane.b32.xlu0 %v354, 110
        %v522 = vpop.permute.xlu0 %521
        %vm523 = vcmask 900096
        %v524 = vsel %vm523, %v516, %v518
        %v525 = vsel %vm523, %v518, %v520
        %v526 = vsel %vm523, %v520, %v522
        %v528 = vsel %vm273, %v514, 0
        %v531 = vsel %vm277, %v524, 0
        %v534 = vsel %vm277, %v525, 0
        %v537 = vsel %vm277, %v526, 0
        %539 = vmatpush.bf16.msra.mxu0 0
        %540 = vmatpush.bf16.msra.mxu0 0
        %541 = vmatpush.bf16.msra.mxu0 0
        %542 = vmatpush.bf16.msra.mxu0 0
        %543 = vmatpush.bf16.msra.mxu0 0
        %544 = vmatpush.bf16.msra.mxu0 0
        %545 = vmatpush.bf16.msra.mxu0 0
        %546 = vmatpush.bf16.msra.mxu0 %v531
        %547 = vmatmul.bf16.gmra.mxu0 %v528
        %v548 = vpop.f32.mrf.mxu0
        %v549 = vadd.f32 0.0, %v548
        %v550 = vpop.f32.mrf.mxu0
        %v551 = vadd.f32 0.0, %v550
        %552 = vdwg.mxu0
        %553 = vmatpush.bf16.msra.mxu0 0
        %554 = vmatpush.bf16.msra.mxu0 0
        %555 = vmatpush.bf16.msra.mxu0 0
        %556 = vmatpush.bf16.msra.mxu0 0
        %557 = vmatpush.bf16.msra.mxu0 0
        %558 = vmatpush.bf16.msra.mxu0 0
        %559 = vmatpush.bf16.msra.mxu0 0
        %560 = vmatpush.bf16.msra.mxu0 %v534
        %561 = vmatmul.bf16.gmra.mxu0 %v528
        %v562 = vpop.f32.mrf.mxu0
        %v563 = vadd.f32 0.0, %v562
        %v564 = vpop.f32.mrf.mxu0
        %v565 = vadd.f32 0.0, %v564
        %566 = vdwg.mxu0
        %567 = vmatpush.bf16.msra.mxu0 0
        %568 = vmatpush.bf16.msra.mxu0 0
        %569 = vmatpush.bf16.msra.mxu0 0
        %570 = vmatpush.bf16.msra.mxu0 0
        %571 = vmatpush.bf16.msra.mxu0 0
        %572 = vmatpush.bf16.msra.mxu0 0
        %573 = vmatpush.bf16.msra.mxu0 0
        %574 = vmatpush.bf16.msra.mxu0 %v537
        %575 = vmatmul.bf16.gmra.mxu0 %v528
        %v576 = vpop.f32.mrf.mxu0
        %v577 = vadd.f32 0.0, %v576
        %v578 = vpop.f32.mrf.mxu0
        %v579 = vadd.f32 0.0, %v578
        %580 = vdwg.mxu0
        %v581 = vadd.f32 %v501, %v549
        %v582 = vadd.f32 %v502, %v563
        %v583 = vadd.f32 %v503, %v577
        %v584 = vadd.f32 %v504, %v551
        %v585 = vadd.f32 %v505, %v565
        %v586 = vadd.f32 %v506, %v579
        %s587 = scalar_lea.vmem %s229, 32
        %v588 = vld [vmem:[%s587] sm:$0xf]
        %v589 = vld [vmem:[%s587 + $0x4] sm:$0xf]
        %v592 = vunpack.c.l.b16 %v588
        %v593 = vunpack.c.l.b16 %v589
        %v594 = vpack.c.b16 %v593, %v592
        %595 = vrot.lane.b32.xlu0 %v351, 109
        %v596 = vpop.permute.xlu0 %595
        %597 = vrot.lane.b32.xlu0 %v352, 109
        %v598 = vpop.permute.xlu0 %597
        %599 = vrot.lane.b32.xlu0 %v353, 109
        %v600 = vpop.permute.xlu0 %599
        %601 = vrot.lane.b32.xlu0 %v354, 109
        %v602 = vpop.permute.xlu0 %601
        %vm603 = vcmask 891904
        %v604 = vsel %vm603, %v596, %v598
        %v605 = vsel %vm603, %v598, %v600
        %v606 = vsel %vm603, %v600, %v602
        %v608 = vsel %vm273, %v594, 0
        %v611 = vsel %vm277, %v604, 0
        %v614 = vsel %vm277, %v605, 0
        %v617 = vsel %vm277, %v606, 0
        %619 = vmatpush.bf16.msra.mxu0 0
        %620 = vmatpush.bf16.msra.mxu0 0
        %621 = vmatpush.bf16.msra.mxu0 0
        %622 = vmatpush.bf16.msra.mxu0 0
        %623 = vmatpush.bf16.msra.mxu0 0
        %624 = vmatpush.bf16.msra.mxu0 0
        %625 = vmatpush.bf16.msra.mxu0 0
        %626 = vmatpush.bf16.msra.mxu0 %v611
        %627 = vmatmul.bf16.gmra.mxu0 %v608
        %v628 = vpop.f32.mrf.mxu0
        %v629 = vadd.f32 0.0, %v628
        %v630 = vpop.f32.mrf.mxu0
        %v631 = vadd.f32 0.0, %v630
        %632 = vdwg.mxu0
        %633 = vmatpush.bf16.msra.mxu0 0
        %634 = vmatpush.bf16.msra.mxu0 0
        %635 = vmatpush.bf16.msra.mxu0 0
        %636 = vmatpush.bf16.msra.mxu0 0
        %637 = vmatpush.bf16.msra.mxu0 0
        %638 = vmatpush.bf16.msra.mxu0 0
        %639 = vmatpush.bf16.msra.mxu0 0
        %640 = vmatpush.bf16.msra.mxu0 %v614
        %641 = vmatmul.bf16.gmra.mxu0 %v608
        %v642 = vpop.f32.mrf.mxu0
        %v643 = vadd.f32 0.0, %v642
        %v644 = vpop.f32.mrf.mxu0
        %v645 = vadd.f32 0.0, %v644
        %646 = vdwg.mxu0
        %647 = vmatpush.bf16.msra.mxu0 0
        %648 = vmatpush.bf16.msra.mxu0 0
        %649 = vmatpush.bf16.msra.mxu0 0
        %650 = vmatpush.bf16.msra.mxu0 0
        %651 = vmatpush.bf16.msra.mxu0 0
        %652 = vmatpush.bf16.msra.mxu0 0
        %653 = vmatpush.bf16.msra.mxu0 0
        %654 = vmatpush.bf16.msra.mxu0 %v617
        %655 = vmatmul.bf16.gmra.mxu0 %v608
        %v656 = vpop.f32.mrf.mxu0
        %v657 = vadd.f32 0.0, %v656
        %v658 = vpop.f32.mrf.mxu0
        %v659 = vadd.f32 0.0, %v658
        %660 = vdwg.mxu0
        %v661 = vadd.f32 %v581, %v629
        %v662 = vadd.f32 %v582, %v643
        %v663 = vadd.f32 %v583, %v657
        %v664 = vadd.f32 %v584, %v631
        %v665 = vadd.f32 %v585, %v645
        %v666 = vadd.f32 %v586, %v659
        %s667 = scalar_lea.vmem %s229, 40
        %v668 = vld [vmem:[%s667] sm:$0xf]
        %v669 = vld [vmem:[%s667 + $0x4] sm:$0xf]
        %v672 = vunpack.c.l.b16 %v668
        %v673 = vunpack.c.l.b16 %v669
        %v674 = vpack.c.b16 %v673, %v672
        %675 = vrot.lane.b32.xlu0 %v351, 108
        %v676 = vpop.permute.xlu0 %675
        %677 = vrot.lane.b32.xlu0 %v352, 108
        %v678 = vpop.permute.xlu0 %677
        %679 = vrot.lane.b32.xlu0 %v353, 108
        %v680 = vpop.permute.xlu0 %679
        %681 = vrot.lane.b32.xlu0 %v354, 108
        %v682 = vpop.permute.xlu0 %681
        %vm683 = vcmask 883712
        %v684 = vsel %vm683, %v676, %v678
        %v685 = vsel %vm683, %v678, %v680
        %v686 = vsel %vm683, %v680, %v682
        %v688 = vsel %vm273, %v674, 0
        %v691 = vsel %vm277, %v684, 0
        %v694 = vsel %vm277, %v685, 0
        %v697 = vsel %vm277, %v686, 0
        %699 = vmatpush.bf16.msra.mxu0 0
        %700 = vmatpush.bf16.msra.mxu0 0
        %701 = vmatpush.bf16.msra.mxu0 0
        %702 = vmatpush.bf16.msra.mxu0 0
        %703 = vmatpush.bf16.msra.mxu0 0
        %704 = vmatpush.bf16.msra.mxu0 0
        %705 = vmatpush.bf16.msra.mxu0 0
        %706 = vmatpush.bf16.msra.mxu0 %v691
        %707 = vmatmul.bf16.gmra.mxu0 %v688
        %v708 = vpop.f32.mrf.mxu0
        %v709 = vadd.f32 0.0, %v708
        %v710 = vpop.f32.mrf.mxu0
        %v711 = vadd.f32 0.0, %v710
        %712 = vdwg.mxu0
        %713 = vmatpush.bf16.msra.mxu0 0
        %714 = vmatpush.bf16.msra.mxu0 0
        %715 = vmatpush.bf16.msra.mxu0 0
        %716 = vmatpush.bf16.msra.mxu0 0
        %717 = vmatpush.bf16.msra.mxu0 0
        %718 = vmatpush.bf16.msra.mxu0 0
        %719 = vmatpush.bf16.msra.mxu0 0
        %720 = vmatpush.bf16.msra.mxu0 %v694
        %721 = vmatmul.bf16.gmra.mxu0 %v688
        %v722 = vpop.f32.mrf.mxu0
        %v723 = vadd.f32 0.0, %v722
        %v724 = vpop.f32.mrf.mxu0
        %v725 = vadd.f32 0.0, %v724
        %726 = vdwg.mxu0
        %727 = vmatpush.bf16.msra.mxu0 0
        %728 = vmatpush.bf16.msra.mxu0 0
        %729 = vmatpush.bf16.msra.mxu0 0
        %730 = vmatpush.bf16.msra.mxu0 0
        %731 = vmatpush.bf16.msra.mxu0 0
        %732 = vmatpush.bf16.msra.mxu0 0
        %733 = vmatpush.bf16.msra.mxu0 0
        %734 = vmatpush.bf16.msra.mxu0 %v697
        %735 = vmatmul.bf16.gmra.mxu0 %v688
        %v736 = vpop.f32.mrf.mxu0
        %v737 = vadd.f32 0.0, %v736
        %v738 = vpop.f32.mrf.mxu0
        %v739 = vadd.f32 0.0, %v738
        %740 = vdwg.mxu0
        %v741 = vadd.f32 %v661, %v709
        %v742 = vadd.f32 %v662, %v723
        %v743 = vadd.f32 %v663, %v737
        %v744 = vadd.f32 %v664, %v711
        %v745 = vadd.f32 %v665, %v725
        %v746 = vadd.f32 %v666, %v739
        %s747 = scalar_lea.vmem %s229, 48
        %v748 = vld [vmem:[%s747] sm:$0xf]
        %v749 = vld [vmem:[%s747 + $0x4] sm:$0xf]
        %v752 = vunpack.c.l.b16 %v748
        %v753 = vunpack.c.l.b16 %v749
        %v754 = vpack.c.b16 %v753, %v752
        %755 = vrot.lane.b32.xlu0 %v351, 92
        %v756 = vpop.permute.xlu0 %755
        %757 = vrot.lane.b32.xlu0 %v352, 92
        %v758 = vpop.permute.xlu0 %757
        %759 = vrot.lane.b32.xlu0 %v353, 92
        %v760 = vpop.permute.xlu0 %759
        %761 = vrot.lane.b32.xlu0 %v354, 92
        %v762 = vpop.permute.xlu0 %761
        %vm763 = vcmask 752640
        %v764 = vsel %vm763, %v756, %v758
        %v765 = vsel %vm763, %v758, %v760
        %v766 = vsel %vm763, %v760, %v762
        %v768 = vsel %vm273, %v754, 0
        %v771 = vsel %vm277, %v764, 0
        %v774 = vsel %vm277, %v765, 0
        %v777 = vsel %vm277, %v766, 0
        %779 = vmatpush.bf16.msra.mxu0 0
        %780 = vmatpush.bf16.msra.mxu0 0
        %781 = vmatpush.bf16.msra.mxu0 0
        %782 = vmatpush.bf16.msra.mxu0 0
        %783 = vmatpush.bf16.msra.mxu0 0
        %784 = vmatpush.bf16.msra.mxu0 0
        %785 = vmatpush.bf16.msra.mxu0 0
        %786 = vmatpush.bf16.msra.mxu0 %v771
        %787 = vmatmul.bf16.gmra.mxu0 %v768
        %v788 = vpop.f32.mrf.mxu0
        %v789 = vadd.f32 0.0, %v788
        %v790 = vpop.f32.mrf.mxu0
        %v791 = vadd.f32 0.0, %v790
        %792 = vdwg.mxu0
        %793 = vmatpush.bf16.msra.mxu0 0
        %794 = vmatpush.bf16.msra.mxu0 0
        %795 = vmatpush.bf16.msra.mxu0 0
        %796 = vmatpush.bf16.msra.mxu0 0
        %797 = vmatpush.bf16.msra.mxu0 0
        %798 = vmatpush.bf16.msra.mxu0 0
        %799 = vmatpush.bf16.msra.mxu0 0
        %800 = vmatpush.bf16.msra.mxu0 %v774
        %801 = vmatmul.bf16.gmra.mxu0 %v768
        %v802 = vpop.f32.mrf.mxu0
        %v803 = vadd.f32 0.0, %v802
        %v804 = vpop.f32.mrf.mxu0
        %v805 = vadd.f32 0.0, %v804
        %806 = vdwg.mxu0
        %807 = vmatpush.bf16.msra.mxu0 0
        %808 = vmatpush.bf16.msra.mxu0 0
        %809 = vmatpush.bf16.msra.mxu0 0
        %810 = vmatpush.bf16.msra.mxu0 0
        %811 = vmatpush.bf16.msra.mxu0 0
        %812 = vmatpush.bf16.msra.mxu0 0
        %813 = vmatpush.bf16.msra.mxu0 0
        %814 = vmatpush.bf16.msra.mxu0 %v777
        %815 = vmatmul.bf16.gmra.mxu0 %v768
        %v816 = vpop.f32.mrf.mxu0
        %v817 = vadd.f32 0.0, %v816
        %v818 = vpop.f32.mrf.mxu0
        %v819 = vadd.f32 0.0, %v818
        %820 = vdwg.mxu0
        %v821 = vadd.f32 %v741, %v789
        %v822 = vadd.f32 %v742, %v803
        %v823 = vadd.f32 %v743, %v817
        %v824 = vadd.f32 %v744, %v791
        %v825 = vadd.f32 %v745, %v805
        %v826 = vadd.f32 %v746, %v819
        %s827 = scalar_lea.vmem %s229, 56
        %v828 = vld [vmem:[%s827] sm:$0xf]
        %v829 = vld [vmem:[%s827 + $0x4] sm:$0xf]
        %v832 = vunpack.c.l.b16 %v828
        %v833 = vunpack.c.l.b16 %v829
        %v834 = vpack.c.b16 %v833, %v832
        %835 = vrot.lane.b32.xlu0 %v351, 91
        %v836 = vpop.permute.xlu0 %835
        %837 = vrot.lane.b32.xlu0 %v352, 91
        %v838 = vpop.permute.xlu0 %837
        %839 = vrot.lane.b32.xlu0 %v353, 91
        %v840 = vpop.permute.xlu0 %839
        %841 = vrot.lane.b32.xlu0 %v354, 91
        %v842 = vpop.permute.xlu0 %841
        %vm843 = vcmask 744448
        %v844 = vsel %vm843, %v836, %v838
        %v845 = vsel %vm843, %v838, %v840
        %v846 = vsel %vm843, %v840, %v842
        %v848 = vsel %vm273, %v834, 0
        %v851 = vsel %vm277, %v844, 0
        %v854 = vsel %vm277, %v845, 0
        %v857 = vsel %vm277, %v846, 0
        %859 = vmatpush.bf16.msra.mxu0 0
        %860 = vmatpush.bf16.msra.mxu0 0
        %861 = vmatpush.bf16.msra.mxu0 0
        %862 = vmatpush.bf16.msra.mxu0 0
        %863 = vmatpush.bf16.msra.mxu0 0
        %864 = vmatpush.bf16.msra.mxu0 0
        %865 = vmatpush.bf16.msra.mxu0 0
        %866 = vmatpush.bf16.msra.mxu0 %v851
        %867 = vmatmul.bf16.gmra.mxu0 %v848
        %v868 = vpop.f32.mrf.mxu0
        %v869 = vadd.f32 0.0, %v868
        %v870 = vpop.f32.mrf.mxu0
        %v871 = vadd.f32 0.0, %v870
        %872 = vdwg.mxu0
        %873 = vmatpush.bf16.msra.mxu0 0
        %874 = vmatpush.bf16.msra.mxu0 0
        %875 = vmatpush.bf16.msra.mxu0 0
        %876 = vmatpush.bf16.msra.mxu0 0
        %877 = vmatpush.bf16.msra.mxu0 0
        %878 = vmatpush.bf16.msra.mxu0 0
        %879 = vmatpush.bf16.msra.mxu0 0
        %880 = vmatpush.bf16.msra.mxu0 %v854
        %881 = vmatmul.bf16.gmra.mxu0 %v848
        %v882 = vpop.f32.mrf.mxu0
        %v883 = vadd.f32 0.0, %v882
        %v884 = vpop.f32.mrf.mxu0
        %v885 = vadd.f32 0.0, %v884
        %886 = vdwg.mxu0
        %887 = vmatpush.bf16.msra.mxu0 0
        %888 = vmatpush.bf16.msra.mxu0 0
        %889 = vmatpush.bf16.msra.mxu0 0
        %890 = vmatpush.bf16.msra.mxu0 0
        %891 = vmatpush.bf16.msra.mxu0 0
        %892 = vmatpush.bf16.msra.mxu0 0
        %893 = vmatpush.bf16.msra.mxu0 0
        %894 = vmatpush.bf16.msra.mxu0 %v857
        %895 = vmatmul.bf16.gmra.mxu0 %v848
        %v896 = vpop.f32.mrf.mxu0
        %v897 = vadd.f32 0.0, %v896
        %v898 = vpop.f32.mrf.mxu0
        %v899 = vadd.f32 0.0, %v898
        %900 = vdwg.mxu0
        %v901 = vadd.f32 %v821, %v869
        %v902 = vadd.f32 %v822, %v883
        %v903 = vadd.f32 %v823, %v897
        %v904 = vadd.f32 %v824, %v871
        %v905 = vadd.f32 %v825, %v885
        %v906 = vadd.f32 %v826, %v899
        %s907 = scalar_lea.vmem %s229, 64
        %v908 = vld [vmem:[%s907] sm:$0xf]
        %v909 = vld [vmem:[%s907 + $0x4] sm:$0xf]
        %v912 = vunpack.c.l.b16 %v908
        %v913 = vunpack.c.l.b16 %v909
        %v914 = vpack.c.b16 %v913, %v912
        %915 = vrot.lane.b32.xlu0 %v351, 90
        %v916 = vpop.permute.xlu0 %915
        %917 = vrot.lane.b32.xlu0 %v352, 90
        %v918 = vpop.permute.xlu0 %917
        %919 = vrot.lane.b32.xlu0 %v353, 90
        %v920 = vpop.permute.xlu0 %919
        %921 = vrot.lane.b32.xlu0 %v354, 90
        %v922 = vpop.permute.xlu0 %921
        %vm923 = vcmask 736256
        %v924 = vsel %vm923, %v916, %v918
        %v925 = vsel %vm923, %v918, %v920
        %v926 = vsel %vm923, %v920, %v922
        %v928 = vsel %vm273, %v914, 0
        %v931 = vsel %vm277, %v924, 0
        %v934 = vsel %vm277, %v925, 0
        %v937 = vsel %vm277, %v926, 0
        %939 = vmatpush.bf16.msra.mxu0 0
        %940 = vmatpush.bf16.msra.mxu0 0
        %941 = vmatpush.bf16.msra.mxu0 0
        %942 = vmatpush.bf16.msra.mxu0 0
        %943 = vmatpush.bf16.msra.mxu0 0
        %944 = vmatpush.bf16.msra.mxu0 0
        %945 = vmatpush.bf16.msra.mxu0 0
        %946 = vmatpush.bf16.msra.mxu0 %v931
        %947 = vmatmul.bf16.gmra.mxu0 %v928
        %v948 = vpop.f32.mrf.mxu0
        %v949 = vadd.f32 0.0, %v948
        %v950 = vpop.f32.mrf.mxu0
        %v951 = vadd.f32 0.0, %v950
        %952 = vdwg.mxu0
        %953 = vmatpush.bf16.msra.mxu0 0
        %954 = vmatpush.bf16.msra.mxu0 0
        %955 = vmatpush.bf16.msra.mxu0 0
        %956 = vmatpush.bf16.msra.mxu0 0
        %957 = vmatpush.bf16.msra.mxu0 0
        %958 = vmatpush.bf16.msra.mxu0 0
        %959 = vmatpush.bf16.msra.mxu0 0
        %960 = vmatpush.bf16.msra.mxu0 %v934
        %961 = vmatmul.bf16.gmra.mxu0 %v928
        %v962 = vpop.f32.mrf.mxu0
        %v963 = vadd.f32 0.0, %v962
        %v964 = vpop.f32.mrf.mxu0
        %v965 = vadd.f32 0.0, %v964
        %966 = vdwg.mxu0
        %967 = vmatpush.bf16.msra.mxu0 0
        %968 = vmatpush.bf16.msra.mxu0 0
        %969 = vmatpush.bf16.msra.mxu0 0
        %970 = vmatpush.bf16.msra.mxu0 0
        %971 = vmatpush.bf16.msra.mxu0 0
        %972 = vmatpush.bf16.msra.mxu0 0
        %973 = vmatpush.bf16.msra.mxu0 0
        %974 = vmatpush.bf16.msra.mxu0 %v937
        %975 = vmatmul.bf16.gmra.mxu0 %v928
        %v976 = vpop.f32.mrf.mxu0
        %v977 = vadd.f32 0.0, %v976
        %v978 = vpop.f32.mrf.mxu0
        %v979 = vadd.f32 0.0, %v978
        %980 = vdwg.mxu0
        %v981 = vadd.f32 %v901, %v949
        %v982 = vadd.f32 %v902, %v963
        %v983 = vadd.f32 %v903, %v977
        %v984 = vadd.f32 %v904, %v951
        %v985 = vadd.f32 %v905, %v965
        %v986 = vadd.f32 %v906, %v979
        %987 = vst [vmem:[#allocation2] sm:$0xff] %v981
        %988 = vst [vmem:[#allocation2 + $0x8] sm:$0xff] %v982
        %989 = vst [vmem:[#allocation2 + $0x10] sm:$0xff] %v983
        %990 = vst [vmem:[#allocation2 + $0x18] sm:$0xff] %v984
        %991 = vst [vmem:[#allocation2 + $0x20] sm:$0xff] %v985
        %992 = vst [vmem:[#allocation2 + $0x28] sm:$0xff] %v986
        // Predicated region
        $region41: #{tpu_custom_call.1} parent=35 // pred_check
          %p993 = pneg %p240
        $region42: #{tpu_custom_call.1} parent=35 // pred_check_branch
          %995 = sbr.rel (%p993) target = $region44
        $region43: #{tpu_custom_call.1} parent=35 // pred_region
          %v996 = vld [vmem:[#allocation2] sm:$0xff]
          %v997 = vld [vmem:[#allocation2 + $0x8] sm:$0xff]
          %v998 = vld [vmem:[#allocation2 + $0x10] sm:$0xff]
          %v999 = vld [vmem:[#allocation2 + $0x18] sm:$0xff]
          %v1000 = vld [vmem:[#allocation2 + $0x20] sm:$0xff]
          %v1001 = vld [vmem:[#allocation2 + $0x28] sm:$0xff]
          %v1002 = vld [vmem:[%s1] sm:$0xff]
          %v1003 = vld [vmem:[%s1 + $0x8] sm:$0xff]
          %1005 = vset.pattern.permute.xlu0 0
          %1006 = vperm.xlu0 %1005, %v1002
          %v1007 = vpop.permute.xlu0 %1006
          %1010 = vset.pattern.permute.xlu0 0
          %1011 = vperm.xlu0 %1010, %v1003
          %v1012 = vpop.permute.xlu0 %1011
          %v1014 = vadd.f32 %v996, %v1007
          %v1015 = vadd.f32 %v997, %v1007
          %v1016 = vadd.f32 %v998, %v1007
          %v1017 = vadd.f32 %v999, %v1012
          %v1018 = vadd.f32 %v1000, %v1012
          %v1019 = vadd.f32 %v1001, %v1012
          %v1020 = vld [vmem:[%s3] sm:$0x7]
          %v1022 = vperm.slane %v1020, 0
          %v1023 = vperm.slane %v1020, 1
          %v1024 = vperm.slane %v1020, 2
          %v1028 = vmul.f32 %v1014, %v1022
          %v1029 = vmul.f32 %v1015, %v1023
          %v1030 = vmul.f32 %v1016, %v1024
          %v1031 = vmul.f32 %v1017, %v1022
          %v1032 = vmul.f32 %v1018, %v1023
          %v1033 = vmul.f32 %v1019, %v1024
          %1034 = vst [vmem:[%s225] sm:$0xff] %v1028
          %1035 = vst [vmem:[%s225 + $0x8] sm:$0xff] %v1029
          %1036 = vst [vmem:[%s225 + $0x10] sm:$0xff] %v1030
          %1037 = vst [vmem:[%s225 + $0x18] sm:$0xff] %v1031
          %1038 = vst [vmem:[%s225 + $0x20] sm:$0xff] %v1032
          %1039 = vst [vmem:[%s225 + $0x28] sm:$0xff] %v1033
        $region44: #{tpu_custom_call.1} parent=35 // pred_fallthru
          _
        %s1040 = sand.u32 %s134, 1
        %s1041 = scalar_lea.sflag [#allocation4], %s1040
        %s1042 = sand.u32 %s134, 1
        %s1043 = smul.addr %s1042, 48
        %s1044 = scalar_lea.vmem [#allocation3], %s1043
        // Predicated region
        $region45: #{tpu_custom_call.1} parent=35 // pred_check
          %p1045 = pneg %p144
        $region46: #{tpu_custom_call.1} parent=35 // pred_check_branch
          %1047 = sbr.rel (%p1045) target = $region48
        $region47: #{tpu_custom_call.1} parent=35 // pred_region
          %1049 = vsyncadd %s1041, 0
          %s1050 = smul.addr %s22, 6
          %s1051 = smul.addr %s1050, 8
          %s1052 = scalar_lea.hbm %s4, %s1051
          %s1053 = sshll.u32 %s1044, 4
          %s1054 = int_to_ptr.vmem [resolvable:$true] %s1053
          %s1055 = sshll.u32 %s1052, 4
          %s1056 = int_to_ptr.hbm [resolvable:$true] %s1055
          %1061 = dma.vmem_to_hbm [thread:$0]  %s1054, 768, %s1056, %s1041, 384, 384, 24
        $region48: #{tpu_custom_call.1} parent=35 // pred_fallthru
          _
      $region36: #{tpu_custom_call.1} parent=5 // pred_fallthru
        _
      %p1062 = scmp.le.s32.totalorder 2, %s13
      // Predicated region
      $region49: #{tpu_custom_call.1} parent=5 // pred_check
        %p1063 = pneg %p1062
      $region50: #{tpu_custom_call.1} parent=5 // pred_check_branch
        %1065 = sbr.rel (%p1063) target = $region52
      $region51: #{tpu_custom_call.1} parent=5 // pred_region
        %s1066 = ssub.s32 %s13, 2
        // Predicated region
        $region53: #{tpu_custom_call.1} parent=51 // pred_check
          %p1067 = pneg %p150
        $region54: #{tpu_custom_call.1} parent=51 // pred_check_branch
          %1069 = sbr.rel (%p1067) target = $region56
        $region55: #{tpu_custom_call.1} parent=51 // pred_region
          %s1070 = sand.u32 %s135, 1
          %s1071 = scalar_lea.sflag [#allocation4], %s1070
          %s1072 = sand.u32 %s135, 1
          %s1073 = smul.addr %s1072, 48
          %s1074 = scalar_lea.vmem [#allocation3], %s1073
          %1076 = dma.done %s1071, 768
        $region56: #{tpu_custom_call.1} parent=51 // pred_fallthru
          _
      $region52: #{tpu_custom_call.1} parent=5 // pred_fallthru
        _
    $region6: #{tpu_custom_call.1} parent=1 // loop_footer
      %s17 = sadd.s32 1, %s13
    $region7: #{tpu_custom_call.1} parent=1 // loop_footer_branch
      %12 = sbr.rel target = $region3
    $region8: #{tpu_custom_call.1} parent=1 // loop_exit
      _
    %1077 = vsyncpa [#allocation4], 1
    %s1078 = scalar_lea.sflag [#allocation4], 1
    %1079 = vsyncpa %s1078, 1

</llo_original>
